<compile_context>
chip_gen: v7x
topology: tpu7x:2x2x1
jax: 0.10.0
libtpu: 0.0.40
codegen_flags: <defaults>
</compile_context>

<pallas_src>
import functools

import jax
import jax.numpy as jnp
from jax.experimental import pallas as pl
from jax.experimental.pallas import tpu as pltpu

_LANES = 128
_SUBLANES = 8
_TARGET_BLOCK_BYTES = 2 << 20  # ~2 MiB per input block per pipeline buffer.


def _round_up(x, m):
    return ((x + m - 1) // m) * m


def _num_tensorcores():
    """Best-effort TensorCores-per-chip count (2 on v7x, 1 on v5e/v6e)."""
    try:
        info = pltpu.get_tpu_info()
        for name in ("num_cores", "num_tensorcores", "tensor_cores_per_chip",
                     "cores_per_chip", "num_cores_per_chip"):
            v = getattr(info, name, None)
            if isinstance(v, int) and v >= 1:
                return max(1, min(v, 2))
    except Exception:
        pass
    try:
        kind = jax.devices()[0].device_kind.lower()
        if "v7" in kind or "7x" in kind:
            return 2
    except Exception:
        pass
    return 1


def _powsum(err, alpha):
    """Pointwise err**2 + |err|**alpha (err already float32)."""
    abs_err = jnp.abs(err)
    if abs(alpha - 1.5) < 1e-12:
        # |e|**1.5 == |e| * sqrt(|e|): 1 EUP + 1 VPU op, no log(0) hazard.
        pw = abs_err * jnp.sqrt(abs_err)
    elif abs(alpha - 2.0) < 1e-12:
        pw = err * err
    elif abs(alpha - 1.0) < 1e-12:
        pw = abs_err
    else:
        pw = jnp.power(abs_err, jnp.float32(alpha))
    return err * err + pw


def _enhanced_mse_kernel(p_ref, t_ref, out_ref, acc_ref, *,
                         alpha, rows, tile_rows, steps_per_part, grid_blocks,
                         inv_n):
    c = pl.program_id(0)          # part (TensorCore) index
    i = pl.program_id(1)          # sequential streaming step within the part

    @pl.when(i == 0)
    def _init():
        acc_ref[...] = jnp.zeros_like(acc_ref)

    blk = c * steps_per_part + i  # logical (unclamped) block index

    def _accumulate(mask_tail):
        err = p_ref[...].astype(jnp.float32) - t_ref[...].astype(jnp.float32)
        if mask_tail:
            # Rows at or past `rows` are out-of-bounds garbage from the
            # partial trailing block: zero them (select, so NaN-safe).
            row_idx = blk * tile_rows + jax.lax.broadcasted_iota(
                jnp.int32, (tile_rows, _LANES), 0)
            err = jnp.where(row_idx < rows, err, 0.0)
        contrib = _powsum(err, alpha)
        # Fold to (tile_rows//8, 8, 128) and reduce the leading axis: pure
        # full-vreg VPU adds into the (8, 128) accumulator.
        acc_ref[...] += contrib.reshape(
            tile_rows // _SUBLANES, _SUBLANES, _LANES).sum(axis=0)

    # Static specialization: which grid steps need a mask / must be skipped.
    full_blocks = rows // tile_rows
    has_tail = (rows % tile_rows) != 0
    num_blocks = full_blocks + (1 if has_tail else 0)
    has_clamped = grid_blocks != num_blocks

    if not has_tail and not has_clamped:
        # Every grid step is a fully-valid tile: no masking, no predication.
        _accumulate(mask_tail=False)
    else:
        @pl.when(blk < full_blocks)
        def _interior():
            _accumulate(mask_tail=False)

        if has_tail:
            @pl.when(blk == full_blocks)
            def _tail():
                _accumulate(mask_tail=True)
        # blk >= num_blocks (duplicated clamped tile): skip compute entirely.

    @pl.when(i == pl.num_programs(1) - 1)
    def _finalize():
        # 1/N scaling folded in here; host epilogue is a single tiny reduce.
        out_ref[...] = acc_ref[...] * inv_n


def _host_tail_sum(p_tail, t_tail, alpha):
    err = p_tail.astype(jnp.float32) - t_tail.astype(jnp.float32)
    return jnp.sum(_powsum(err, alpha))


def enhanced_mse_loss(predictions, targets, alpha=1.5):
    """Pallas TPU implementation of EnhancedMSELoss.forward."""
    assert predictions.shape == targets.shape, "shape mismatch"
    alpha = float(alpha)
    assert alpha > 0.0, "alpha must be positive"
    n = predictions.size
    assert n > 0, "empty input"
    inv_n = 1.0 / n

    p = predictions.reshape(-1)
    t = targets.reshape(-1)

    # Ragged (<128 element) lane tail: computed on host directly from the
    # original flat arrays (tiny), instead of jnp.pad-ing a full HBM copy of
    # both inputs (which doubled HBM traffic for ragged inputs).
    rem = n % _LANES
    aligned = n - rem
    tail_sum = None
    if rem:
        tail_sum = _host_tail_sum(p[aligned:], t[aligned:], alpha)
        if aligned == 0:
            return tail_sum * jnp.float32(inv_n)
        p = p[:aligned]
        t = t[:aligned]

    rows = aligned // _LANES
    p2 = p.reshape(rows, _LANES)
    t2 = t.reshape(rows, _LANES)

    # Tile sizing: keep each input block ~2 MiB regardless of dtype (bf16 gets
    # twice the rows), past the ~85% HBM-roofline plateau on v5e/v6e/v7x while
    # fitting comfortably inside the 32 MiB scoped VMEM requested below.
    itemsize = max(p2.dtype.itemsize, t2.dtype.itemsize)
    packing = max(4 // p2.dtype.itemsize, 4 // t2.dtype.itemsize, 1)
    row_align = _SUBLANES * packing
    tile_rows = max(_TARGET_BLOCK_BYTES // (itemsize * _LANES), row_align)
    tile_rows = min(tile_rows, _round_up(rows, row_align))
    tile_rows = _round_up(tile_rows, row_align)

    num_blocks = pl.cdiv(rows, tile_rows)

    # Split the stream across TensorCores only when the chip actually has more
    # than one (v7x); on v5e/v6e this stays a single sequential part, so there
    # is no wasted clamped-tile DMA or masked compute step.
    cores = _num_tensorcores()
    num_parallel = cores if (cores > 1 and num_blocks >= cores) else 1
    steps = pl.cdiv(num_blocks, num_parallel)
    grid_blocks = num_parallel * steps

    def in_map(c, i):
        # Clamp so a duplicated tail tile (odd num_blocks on a 2-core split)
        # stays in bounds; its compute is skipped inside the kernel.
        return (jnp.minimum(c * steps + i, num_blocks - 1), 0)

    kernel = functools.partial(
        _enhanced_mse_kernel,
        alpha=alpha, rows=rows, tile_rows=tile_rows, steps_per_part=steps,
        grid_blocks=grid_blocks, inv_n=inv_n)

    # Each part owns an (8, 128) output slab holding its already 1/N-scaled
    # partial sums; the host epilogue is one tiny reduce.
    # TODO(synk): on v7x, verify in the Mosaic dump that the leading
    # "parallel" axis is actually sharded across both TensorCores; switch that
    # axis to pltpu.CORE_PARALLEL if it is not.
    partials = pl.pallas_call(
        kernel,
        out_shape=jax.ShapeDtypeStruct(
            (num_parallel * _SUBLANES, _LANES), jnp.float32),
        grid_spec=pltpu.PrefetchScalarGridSpec(
            num_scalar_prefetch=0,
            grid=(num_parallel, steps),
            in_specs=[
                pl.BlockSpec((tile_rows, _LANES), in_map),
                pl.BlockSpec((tile_rows, _LANES), in_map),
            ],
            out_specs=pl.BlockSpec((_SUBLANES, _LANES), lambda c, i: (c, 0)),
            scratch_shapes=[pltpu.VMEM((_SUBLANES, _LANES), jnp.float32)],
        ),
        compiler_params=pltpu.CompilerParams(
            dimension_semantics=("parallel", "arbitrary"),
            vmem_limit_bytes=32 * 1024 * 1024,
        ),
    )(p2, t2)

    loss = jnp.sum(partials)
    if tail_sum is not None:
        loss = loss + tail_sum * jnp.float32(inv_n)
    return loss


def _reference(predictions, targets, alpha=1.5):
    err = predictions.astype(jnp.float32) - targets.astype(jnp.float32)
    return jnp.mean(err ** 2) + jnp.mean(jnp.abs(err) ** alpha)


if __name__ == "__main__":
    key = jax.random.PRNGKey(0)
    k1, k2, k3, k4, k5, k6, k7, k8 = jax.random.split(key, 8)

    # Primary case: small NCHW-shaped f32 tensors (batch=2, channels=4, 16x16).
    shape = (2, 4, 16, 16)
    predictions = jax.random.normal(k1, shape, dtype=jnp.float32)
    targets = jax.random.normal(k2, shape, dtype=jnp.float32)
    loss = jax.block_until_ready(enhanced_mse_loss(predictions, targets, 1.5))
    ref = _reference(predictions, targets, 1.5)
    assert jnp.allclose(loss, ref, rtol=1e-5, atol=1e-5), (loss, ref)

    # Multi-tile case with a partial trailing tile: exercises the streaming
    # accumulation, the unmasked fast path and the masked tail tile.
    shape2 = (2, 4, 256, 260)
    p_big = jax.random.normal(k3, shape2, dtype=jnp.float32)
    t_big = jax.random.normal(k4, shape2, dtype=jnp.float32)
    loss2 = jax.block_until_ready(enhanced_mse_loss(p_big, t_big, 1.5))
    ref2 = _reference(p_big, t_big, 1.5)
    assert jnp.allclose(loss2, ref2, rtol=1e-4, atol=1e-5), (loss2, ref2)

    # bf16 inputs stream in native dtype; row count below one tile exercises
    # the in-kernel masked tail path.
    p_bf = jax.random.normal(k5, (2, 8, 32), dtype=jnp.bfloat16)
    t_bf = jax.random.normal(k6, (2, 8, 32), dtype=jnp.bfloat16)
    loss3 = jax.block_until_ready(enhanced_mse_loss(p_bf, t_bf, 1.5))
    ref3 = _reference(p_bf, t_bf, 1.5)
    assert jnp.allclose(loss3, ref3, rtol=1e-4, atol=1e-4), (loss3, ref3)

    # Ragged element count (<128 remainder handled on host, no full-array pad).
    p_rag = jax.random.normal(k7, (3, 5, 7), dtype=jnp.float32)
    t_rag = jax.random.normal(k8, (3, 5, 7), dtype=jnp.float32)
    loss4 = jax.block_until_ready(enhanced_mse_loss(p_rag, t_rag, 1.5))
    ref4 = _reference(p_rag, t_rag, 1.5)
    assert jnp.allclose(loss4, ref4, rtol=1e-5, atol=1e-5), (loss4, ref4)

    print("KERNEL_OK")
</pallas_src>

<mosaic_0001>
module attributes {stable_mosaic.version = 11 : i64} {
  func.func @_enhanced_mse_kernel(%arg0: i32, %arg1: i32, %arg2: memref<16x128xf32, #tpu.memory_space<vmem>>, %arg3: memref<16x128xf32, #tpu.memory_space<vmem>>, %arg4: memref<8x128xf32, #tpu.memory_space<vmem>>, %arg5: memref<8x128xf32, #tpu.memory_space<vmem>>) attributes {dimension_semantics = [#tpu.dimension_semantics<parallel>, #tpu.dimension_semantics<arbitrary>], iteration_bounds = array<i64: 1, 1>, scalar_prefetch = 0 : i64, scratch_operands = 1 : i64, tpu.core_type = #tpu.core_type<tc>, window_params = [{transform_indices = @transform_0, window_bounds = array<i64: 16, 128>}, {transform_indices = @transform_1, window_bounds = array<i64: 16, 128>}, {transform_indices = @transform_2, window_bounds = array<i64: 8, 128>}]} {
    %c0_i32 = arith.constant 0 : i32
    %0 = arith.cmpi eq, %arg1, %c0_i32 : i32
    %1 = arith.extui %0 : i1 to i32
    %c0_i32_0 = arith.constant 0 : i32
    %2 = arith.cmpi ne, %1, %c0_i32_0 : i32
    scf.if %2 {
      %cst_10 = arith.constant 0.000000e+00 : f32
      %19 = vector.broadcast %cst_10 : f32 to vector<8x128xf32>
      %c0_11 = arith.constant 0 : index
      %c0_12 = arith.constant 0 : index
      %20 = vector.load %arg5[%c0_11, %c0_12] : memref<8x128xf32, #tpu.memory_space<vmem>>, vector<8x128xf32>
      tpu.vector_store %arg5[%c0_11, %c0_12], %19 {strides = array<i32>} : memref<8x128xf32, #tpu.memory_space<vmem>>, vector<8x128xf32>,
    } else {
    }
    %c0 = arith.constant 0 : index
    %c0_1 = arith.constant 0 : index
    %3 = vector.load %arg2[%c0, %c0_1] : memref<16x128xf32, #tpu.memory_space<vmem>>, vector<16x128xf32>
    %c0_2 = arith.constant 0 : index
    %c0_3 = arith.constant 0 : index
    %4 = vector.load %arg3[%c0_2, %c0_3] : memref<16x128xf32, #tpu.memory_space<vmem>>, vector<16x128xf32>
    %5 = arith.subf %3, %4 : vector<16x128xf32>
    %6 = math.absf %5 : vector<16x128xf32>
    %7 = math.sqrt %6 : vector<16x128xf32>
    %8 = arith.mulf %6, %7 : vector<16x128xf32>
    %9 = arith.mulf %5, %5 : vector<16x128xf32>
    %10 = arith.addf %9, %8 : vector<16x128xf32>
    %c0_4 = arith.constant 0 : index
    %c0_5 = arith.constant 0 : index
    %11 = vector.load %arg5[%c0_4, %c0_5] : memref<8x128xf32, #tpu.memory_space<vmem>>, vector<8x128xf32>
    %12 = vector.shape_cast %10 : vector<16x128xf32> to vector<2x8x128xf32>
    %cst = arith.constant dense<0.000000e+00> : vector<8x128xf32>
    %13 = vector.multi_reduction <add>, %12, %cst [0] : vector<2x8x128xf32> to vector<8x128xf32>
    %14 = arith.addf %11, %13 : vector<8x128xf32>
    %c0_6 = arith.constant 0 : index
    %c0_7 = arith.constant 0 : index
    %15 = vector.load %arg5[%c0_6, %c0_7] : memref<8x128xf32, #tpu.memory_space<vmem>>, vector<8x128xf32>
    tpu.vector_store %arg5[%c0_6, %c0_7], %14 {strides = array<i32>} : memref<8x128xf32, #tpu.memory_space<vmem>>, vector<8x128xf32>,
    %c0_i32_8 = arith.constant 0 : i32
    %16 = arith.cmpi eq, %arg1, %c0_i32_8 : i32
    %17 = arith.extui %16 : i1 to i32
    %c0_i32_9 = arith.constant 0 : i32
    %18 = arith.cmpi ne, %17, %c0_i32_9 : i32
    scf.if %18 {
      %c0_10 = arith.constant 0 : index
      %c0_11 = arith.constant 0 : index
      %19 = vector.load %arg5[%c0_10, %c0_11] : memref<8x128xf32, #tpu.memory_space<vmem>>, vector<8x128xf32>
      %cst_12 = arith.constant 4.8828125E-4 : f32
      %20 = vector.broadcast %cst_12 : f32 to vector<8x128xf32>
      %21 = arith.mulf %19, %20 : vector<8x128xf32>
      %c0_13 = arith.constant 0 : index
      %c0_14 = arith.constant 0 : index
      %22 = vector.load %arg4[%c0_13, %c0_14] : memref<8x128xf32, #tpu.memory_space<vmem>>, vector<8x128xf32>
      tpu.vector_store %arg4[%c0_13, %c0_14], %21 {strides = array<i32>} : memref<8x128xf32, #tpu.memory_space<vmem>>, vector<8x128xf32>,
    } else {
    }
    return
  }
  func.func @transform_0(%arg0: i32, %arg1: i32) -> (i32, i32) {
    %c1_i32 = arith.constant 1 : i32
    %0 = arith.muli %arg0, %c1_i32 : i32
    %1 = arith.addi %0, %arg1 : i32
    %c0_i32 = arith.constant 0 : i32
    %2 = arith.minsi %1, %c0_i32 : i32
    %c0_i32_0 = arith.constant 0 : i32
    %c0_i32_1 = arith.constant 0 : i32
    return %2, %c0_i32_0 : i32, i32
  }
  func.func @transform_1(%arg0: i32, %arg1: i32) -> (i32, i32) {
    %c1_i32 = arith.constant 1 : i32
    %0 = arith.muli %arg0, %c1_i32 : i32
    %1 = arith.addi %0, %arg1 : i32
    %c0_i32 = arith.constant 0 : i32
    %2 = arith.minsi %1, %c0_i32 : i32
    %c0_i32_0 = arith.constant 0 : i32
    %c0_i32_1 = arith.constant 0 : i32
    return %2, %c0_i32_0 : i32, i32
  }
  func.func @transform_2(%arg0: i32, %arg1: i32) -> (i32, i32) {
    %c0_i32 = arith.constant 0 : i32
    %c0_i32_0 = arith.constant 0 : i32
    return %arg0, %c0_i32 : i32, i32
  }
}

</mosaic_0001>

<llo_original>
// kernel: tpu_custom_call.1
$region0: #{tpu_custom_call.1}
  #allocation0 [shape = 'u32[]', space=smem, size = 0x4, offset = 0x4, fixed_abs, tag = 'smem constant byte address 0x4 - core index']
  #allocation1 [shape = 'u32[144,128]{1,0:T(1,128)}', space=vmem, size = 0x12000, scoped, tag = 'internal scratch']
  #allocation2 [shape = 'f32[8,128]{1,0:T(8,128)}', space=vmem, size = 0x1000, scoped, tag = 'scratch operand']
  %s0 = inlined_call_operand.hbm [shape: f32[16,128], index: 0, kind: input, shape index: {}]
  %s1 = inlined_call_operand.hbm [shape: f32[16,128], index: 1, kind: input, shape index: {}]
  %s2 = inlined_call_operand.hbm [shape: f32[8,128], index: 2, kind: output, shape index: {}]
  %s3 = sld [smem:[#allocation0]]
  $region34: #{tpu_custom_call.1} parent=0
    _
  %s5 = ssub.s32 1, %s3
  %s6 = scalar_select 0, %s5, %s3
  $region1: #{tpu_custom_call.1} parent=0
    #allocation3 [shape = 'u8[8192]{0}', space=vmem, size = 0x2000, scoped, tag = 'input window, operand 0, single buffered']
    #allocation4 [shape = 's32[1]{0}', space=sflag, size = 0x4, scoped, tag = 'scoped memory for tpu_custom_call.1']
    #allocation5 [shape = 's32[1]{0}', space=sflag, size = 0x4, scoped, tag = 'scoped memory for tpu_custom_call.1']
    #allocation6 [shape = 'u8[8192]{0}', space=vmem, size = 0x2000, scoped, tag = 'input window, operand 1, single buffered']
    #allocation7 [shape = 's32[1]{0}', space=sflag, size = 0x4, scoped, tag = 'scoped memory for tpu_custom_call.1']
    #allocation8 [shape = 'u8[4096]{0}', space=vmem, size = 0x1000, scoped, tag = 'output window, operand 0, single buffered']
    %7 = vsyncpa [#allocation4], 0
    %8 = vsyncpa [#allocation7], 0
    %9 = vsyncpa [#allocation5], 0
    // Predicated region
    $region2: #{tpu_custom_call.1} parent=1 // pred_check
      _
    $region3: #{tpu_custom_call.1} parent=1 // pred_check_branch
      %11 = sbr.rel (0) target = $region5
    $region4: #{tpu_custom_call.1} parent=1 // pred_region
      %s12 = sadd.s32 0, 0
      %p13 = scmp.lt.s32.totalorder %s12, 0
      %s14 = scalar_select %p13, %s12, 0
      %s15 = smul.u32 2, %s14
      %s17 = ssub.s32 256, 256
      %18 = vsyncadd [#allocation4], %s17
      %s19 = smul.addr %s15, 128
      %s20 = scalar_lea.hbm %s0, %s19
      %s21 = sshll.u32 [#allocation3], 4
      %s22 = int_to_ptr.vmem [resolvable:$true] %s21
      %27 = dma.hbm_to_vmem [thread:$0]  %s20, 256, %s22, [#allocation4], 128, 128, 8
    $region5: #{tpu_custom_call.1} parent=1 // pred_fallthru
      _
    // Predicated region
    $region6: #{tpu_custom_call.1} parent=1 // pred_check
      _
    $region7: #{tpu_custom_call.1} parent=1 // pred_check_branch
      %29 = sbr.rel (0) target = $region9
    $region8: #{tpu_custom_call.1} parent=1 // pred_region
      %s30 = sadd.s32 0, 0
      %p31 = scmp.lt.s32.totalorder %s30, 0
      %s32 = scalar_select %p31, %s30, 0
      %s33 = smul.u32 2, %s32
      %s35 = ssub.s32 256, 256
      %36 = vsyncadd [#allocation7], %s35
      %s37 = smul.addr %s33, 128
      %s38 = scalar_lea.hbm %s1, %s37
      %s39 = sshll.u32 [#allocation6], 4
      %s40 = int_to_ptr.vmem [resolvable:$true] %s39
      %45 = dma.hbm_to_vmem [thread:$0]  %s38, 256, %s40, [#allocation7], 128, 128, 8
    $region9: #{tpu_custom_call.1} parent=1 // pred_fallthru
      _
    // Predicated region
    $region10: #{tpu_custom_call.1} parent=1 // pred_check
      _
    $region11: #{tpu_custom_call.1} parent=1 // pred_check_branch
      %47 = sbr.rel (0) target = $region13
    $region12: #{tpu_custom_call.1} parent=1 // pred_region
      %48 = dma.done [#allocation4], 256
    $region13: #{tpu_custom_call.1} parent=1 // pred_fallthru
      _
    // Predicated region
    $region14: #{tpu_custom_call.1} parent=1 // pred_check
      _
    $region15: #{tpu_custom_call.1} parent=1 // pred_check_branch
      %50 = sbr.rel (0) target = $region17
    $region16: #{tpu_custom_call.1} parent=1 // pred_region
      %51 = dma.done [#allocation7], 256
    $region17: #{tpu_custom_call.1} parent=1 // pred_fallthru
      _
    %s52 = sadd.s32 0, 0
    %p53 = scmp.lt.s32.totalorder %s52, 0
    %s54 = scalar_select %p53, %s52, 0
    %s55 = smul.u32 2, %s54
    %s56 = sadd.s32 0, 0
    %p57 = scmp.lt.s32.totalorder %s56, 0
    %s58 = scalar_select %p57, %s56, 0
    %s59 = smul.u32 2, %s58
    %p60 = scmp.eq.s32.totalorder 0, 0
    // Predicated region
    $region18: #{tpu_custom_call.1} parent=1 // pred_check
      %p61 = pneg %p60
    $region19: #{tpu_custom_call.1} parent=1 // pred_check_branch
      %63 = sbr.rel (%p61) target = $region21
    $region20: #{tpu_custom_call.1} parent=1 // pred_region
      %64 = vst [vmem:[#allocation2] sm:$0xff] 0.0
    $region21: #{tpu_custom_call.1} parent=1 // pred_fallthru
      _
    %v65 = vld [vmem:[#allocation3] sm:$0xff]
    %v66 = vld [vmem:[#allocation3 + $0x8] sm:$0xff]
    %v67 = vld [vmem:[#allocation6] sm:$0xff]
    %v68 = vld [vmem:[#allocation6 + $0x8] sm:$0xff]
    %v69 = vsub.f32 %v65, %v67
    %v70 = vsub.f32 %v66, %v68
    %v71 = vand.u32 2147483647, %v69
    %v72 = vand.u32 2147483647, %v70
    %v73 = vrsqrt.pop %v71
    %v74 = vmul.f32 %v71, %v73
    %vm75 = vcmp.eq.f32.partialorder %v71, inf
    %v76 = vsel %vm75, %v71, %v74
    %vm77 = vcmp.eq.f32.partialorder %v71, 0.0
    %v78 = vand.u32 %v71, 2147483648
    %v79 = vsel %vm77, %v78, %v76
    %v80 = vrsqrt.pop %v72
    %v81 = vmul.f32 %v72, %v80
    %vm82 = vcmp.eq.f32.partialorder %v72, inf
    %v83 = vsel %vm82, %v72, %v81
    %vm84 = vcmp.eq.f32.partialorder %v72, 0.0
    %v85 = vand.u32 %v72, 2147483648
    %v86 = vsel %vm84, %v85, %v83
    %v87 = vmul.f32 %v71, %v79
    %v88 = vmul.f32 %v72, %v86
    %v89 = vmul.f32 %v69, %v69
    %v90 = vmul.f32 %v70, %v70
    %v91 = vadd.f32 %v89, %v87
    %v92 = vadd.f32 %v90, %v88
    %v93 = vld [vmem:[#allocation2] sm:$0xff]
    %v94 = vadd.f32 %v91, %v92
    %v95 = vadd.f32 %v93, %v94
    %96 = vst [vmem:[#allocation2] sm:$0xff] %v95
    // Predicated region
    $region22: #{tpu_custom_call.1} parent=1 // pred_check
      %p97 = pneg %p60
    $region23: #{tpu_custom_call.1} parent=1 // pred_check_branch
      %99 = sbr.rel (%p97) target = $region25
    $region24: #{tpu_custom_call.1} parent=1 // pred_region
      %v100 = vld [vmem:[#allocation2] sm:$0xff]
      %v101 = vmul.f32 %v100, 0.00048828125
      %102 = vst [vmem:[#allocation8] sm:$0xff] %v101
    $region25: #{tpu_custom_call.1} parent=1 // pred_fallthru
      _
    // Predicated region
    $region26: #{tpu_custom_call.1} parent=1 // pred_check
      _
    $region27: #{tpu_custom_call.1} parent=1 // pred_check_branch
      %104 = sbr.rel (0) target = $region29
    $region28: #{tpu_custom_call.1} parent=1 // pred_region
      %s106 = ssub.s32 128, 128
      %107 = vsyncadd [#allocation5], %s106
      %s109 = sshll.u32 [#allocation8], 4
      %s110 = int_to_ptr.vmem [resolvable:$true] %s109
      %112 = dma.vmem_to_hbm [thread:$0]  %s110, 128, %s2, [#allocation5]
    $region29: #{tpu_custom_call.1} parent=1 // pred_fallthru
      _
    // Predicated region
    $region30: #{tpu_custom_call.1} parent=1 // pred_check
      _
    $region31: #{tpu_custom_call.1} parent=1 // pred_check_branch
      %114 = sbr.rel (0) target = $region33
    $region32: #{tpu_custom_call.1} parent=1 // pred_region
      %115 = dma.done [#allocation5], 128
    $region33: #{tpu_custom_call.1} parent=1 // pred_fallthru
      _
    %116 = vsyncpa [#allocation4], 1
    %117 = vsyncpa [#allocation7], 1
    %118 = vsyncpa [#allocation5], 1

</llo_original>
